<compile_context>
chip_gen: v7x
topology: tpu7x:2x2x1
jax: 0.10.0
libtpu: 0.0.40
codegen_flags: <defaults>
</compile_context>

<pallas_src>
import jax
import jax.numpy as jnp
from jax import lax
from jax.experimental import pallas as pl
from jax.experimental.pallas import tpu as pltpu


def mlp_kernel(x_ref, w1_ref, b1_ref, wd_ref, bd_ref, o_ref):
    # x tile: (tm, in)
    x = x_ref[...]

    # First Linear + ReLU  -> (tm, hidden). Bias broadcasts implicitly from (1, hidden).
    h = jnp.dot(x, w1_ref[...], preferred_element_type=jnp.float32) + b1_ref[...]
    h = jnp.maximum(h, 0.0)

    # Second Linear + 2-class softmax collapsed into a single logit difference:
    #   delta[b] = sum_j h[b, j] * (W2[j, 0] - W2[j, 1])
    # Computed as an "NT" matmul (contract last dims) so the result (1, tm) has the
    # batch tile on the lane axis -> lane-dense stores, no cross-lane reduction.
    delta = lax.dot_general(
        wd_ref[...], h,
        dimension_numbers=(((1,), (1,)), ((), ())),
        preferred_element_type=jnp.float32,
    )  # (1, tm)

    z = delta + bd_ref[...]                  # + (b2[0] - b2[1]), broadcast from (1, 1)
    p0 = 1.0 / (1.0 + jnp.exp(-z))           # sigmoid on EUP; softmax(dim=1) class-0 prob

    o_ref[0:1, :] = p0                       # (1, tm) lane-dense store
    o_ref[1:2, :] = 1.0 - p0                 # class-1 prob


def mlp_forward(x, w1, b1, w2, b2, *, tm=512):
    """softmax(relu(x @ W1 + b1) @ W2 + b2, axis=1) -> (B, 2) probabilities.

    Kernel-internal output is (2, B) (lane-dense); transposed back for the caller.
    """
    B, in_dim = x.shape
    hidden = w1.shape[1]
    assert w2.shape == (hidden, 2) and b2.shape[-1] == 2

    # 2-class softmax == logistic regression on the logit difference (done once, outside kernel).
    wd = (w2[:, 0] - w2[:, 1]).reshape(1, hidden).astype(jnp.float32)
    bd = (b2[..., 0] - b2[..., 1]).reshape(1, 1).astype(jnp.float32)

    # Largest lane-aligned batch tile up to `tm`; small batches collapse to one grid step.
    # (tm up to 512 keeps x double-buffers at ~2 * tm * in * 4B, far under scoped VMEM on
    #  v5e/v6e and under v7x's smaller 64 MiB / 32 MiB budget.)
    tm = int(min(tm, max(128, ((B + 127) // 128) * 128)))
    grid = (pl.cdiv(B, tm),)

    out_t = pl.pallas_call(
        mlp_kernel,
        out_shape=jax.ShapeDtypeStruct((2, B), jnp.float32),
        grid_spec=pltpu.PrefetchScalarGridSpec(
            num_scalar_prefetch=0,
            grid=grid,
            in_specs=[
                pl.BlockSpec((tm, in_dim), lambda i: (i, 0)),       # x: streamed per batch tile
                pl.BlockSpec((in_dim, hidden), lambda i: (0, 0)),   # W1: VMEM-resident
                pl.BlockSpec((1, hidden), lambda i: (0, 0)),        # b1: VMEM-resident
                pl.BlockSpec((1, hidden), lambda i: (0, 0)),        # W2[:,0]-W2[:,1]
                pl.BlockSpec((1, 1), lambda i: (0, 0)),             # b2[0]-b2[1]
            ],
            out_specs=pl.BlockSpec((2, tm), lambda i: (0, i)),      # lane-dense (2, B)
        ),
        compiler_params=pltpu.CompilerParams(
            dimension_semantics=("parallel",),   # shard batch tiles across TCs (v7x megacore)
        ),
    )(x, w1, b1, wd, bd)

    return out_t.T  # (B, 2), matching nn.Softmax(dim=1) on the PyTorch output layout


def init_params(key, input_size, hidden_size):
    """Deterministic init mimicking nn.Linear's uniform(-1/sqrt(fan_in), 1/sqrt(fan_in))."""
    k1, k2, k3, k4 = jax.random.split(key, 4)
    lim1 = 1.0 / (input_size ** 0.5)
    lim2 = 1.0 / (hidden_size ** 0.5)
    # Stored transposed relative to PyTorch's (out_features, in_features) so kernel does x @ W.
    w1 = jax.random.uniform(k1, (input_size, hidden_size), jnp.float32, -lim1, lim1)
    b1 = jax.random.uniform(k2, (1, hidden_size), jnp.float32, -lim1, lim1)
    w2 = jax.random.uniform(k3, (hidden_size, 2), jnp.float32, -lim2, lim2)
    b2 = jax.random.uniform(k4, (1, 2), jnp.float32, -lim2, lim2)
    # note: self.temp in the PyTorch module is unused in forward -> omitted
    return w1, b1, w2, b2


if __name__ == "__main__":
    batch = 256
    input_size = 32
    hidden_size = 32

    key = jax.random.PRNGKey(0)
    k_x, k_p = jax.random.split(key)
    x = jax.random.normal(k_x, (batch, input_size), dtype=jnp.float32)
    w1, b1, w2, b2 = init_params(k_p, input_size, hidden_size)

    # tm=128 here so the tiny demo batch still exercises a multi-step grid (grid=(2,)).
    out = mlp_forward(x, w1, b1, w2, b2, tm=128)
    out = jax.block_until_ready(out)

    # Pure-JAX reference of the original forward: softmax(relu(x@W1+b1)@W2+b2, axis=1)
    h_ref = jnp.maximum(
        jnp.dot(x, w1, precision=lax.Precision.HIGHEST) + b1, 0.0)
    logits_ref = jnp.dot(h_ref, w2, precision=lax.Precision.HIGHEST) + b2
    ref = jax.nn.softmax(logits_ref, axis=1)

    assert out.shape == (batch, 2)
    assert bool(jnp.allclose(jnp.sum(out, axis=1), 1.0, atol=1e-5))
    assert bool(jnp.allclose(out, ref, atol=1e-3, rtol=1e-3))

    print("KERNEL_OK")
</pallas_src>

<mosaic_0001>
module attributes {stable_mosaic.version = 11 : i64} {
  func.func @mlp_kernel(%arg0: i32, %arg1: memref<128x32xf32, #tpu.memory_space<vmem>>, %arg2: memref<32x32xf32, #tpu.memory_space<vmem>>, %arg3: memref<1x32xf32, #tpu.memory_space<vmem>>, %arg4: memref<1x32xf32, #tpu.memory_space<vmem>>, %arg5: memref<1x1xf32, #tpu.memory_space<vmem>>, %arg6: memref<2x128xf32, #tpu.memory_space<vmem>>) attributes {dimension_semantics = [#tpu.dimension_semantics<parallel>], iteration_bounds = array<i64: 2>, scalar_prefetch = 0 : i64, scratch_operands = 0 : i64, tpu.core_type = #tpu.core_type<tc>, window_params = [{transform_indices = @transform_0, window_bounds = array<i64: 128, 32>}, {pipeline_mode = #tpu.pipeline_mode<synchronous>, transform_indices = @transform_1, window_bounds = array<i64: 32, 32>}, {pipeline_mode = #tpu.pipeline_mode<synchronous>, transform_indices = @transform_2, window_bounds = array<i64: 1, 32>}, {pipeline_mode = #tpu.pipeline_mode<synchronous>, transform_indices = @transform_3, window_bounds = array<i64: 1, 32>}, {pipeline_mode = #tpu.pipeline_mode<synchronous>, transform_indices = @transform_4, window_bounds = array<i64: 1, 1>}, {transform_indices = @transform_5, window_bounds = array<i64: 2, 128>}]} {
    %c0 = arith.constant 0 : index
    %c0_0 = arith.constant 0 : index
    %0 = vector.load %arg1[%c0, %c0_0] : memref<128x32xf32, #tpu.memory_space<vmem>>, vector<128x32xf32>
    %c0_1 = arith.constant 0 : index
    %c0_2 = arith.constant 0 : index
    %1 = vector.load %arg2[%c0_1, %c0_2] : memref<32x32xf32, #tpu.memory_space<vmem>>, vector<32x32xf32>
    %cst = arith.constant dense<0.000000e+00> : vector<128x32xf32>
    %2 = tpu.matmul %0, %1, %cst {dimension_numbers = #tpu.dot_dimension_numbers<[1], [0], [0], [1], [0, 0, 1, 1], [], []>} : vector<128x32xf32>, vector<32x32xf32>, vector<128x32xf32> -> vector<128x32xf32>
    %c0_3 = arith.constant 0 : index
    %c0_4 = arith.constant 0 : index
    %3 = vector.load %arg3[%c0_3, %c0_4] : memref<1x32xf32, #tpu.memory_space<vmem>>, vector<1x32xf32>
    %4 = vector.broadcast %3 : vector<1x32xf32> to vector<128x32xf32>
    %5 = arith.addf %2, %4 : vector<128x32xf32>
    %cst_5 = arith.constant 0.000000e+00 : f32
    %6 = vector.broadcast %cst_5 : f32 to vector<128x32xf32>
    %7 = arith.maximumf %5, %6 : vector<128x32xf32>
    %c0_6 = arith.constant 0 : index
    %c0_7 = arith.constant 0 : index
    %8 = vector.load %arg4[%c0_6, %c0_7] : memref<1x32xf32, #tpu.memory_space<vmem>>, vector<1x32xf32>
    %cst_8 = arith.constant dense<0.000000e+00> : vector<1x128xf32>
    %9 = tpu.matmul %8, %7, %cst_8 {dimension_numbers = #tpu.dot_dimension_numbers<[1], [1], [0], [0], [0, 0, 1, 0], [], []>} : vector<1x32xf32>, vector<128x32xf32>, vector<1x128xf32> -> vector<1x128xf32>
    %c0_9 = arith.constant 0 : index
    %c0_10 = arith.constant 0 : index
    %10 = vector.load %arg5[%c0_9, %c0_10] : memref<1x1xf32, #tpu.memory_space<vmem>>, vector<1x1xf32>
    %11 = vector.broadcast %10 : vector<1x1xf32> to vector<1x128xf32>
    %12 = arith.addf %9, %11 : vector<1x128xf32>
    %cst_11 = arith.constant 0.000000e+00 : f32
    %13 = vector.broadcast %cst_11 : f32 to vector<1x128xf32>
    %14 = arith.subf %13, %12 : vector<1x128xf32>
    %15 = math.exp %14 : vector<1x128xf32>
    %cst_12 = arith.constant 1.000000e+00 : f32
    %16 = vector.broadcast %cst_12 : f32 to vector<1x128xf32>
    %17 = arith.addf %16, %15 : vector<1x128xf32>
    %cst_13 = arith.constant 1.000000e+00 : f32
    %18 = vector.broadcast %cst_13 : f32 to vector<1x128xf32>
    %19 = arith.divf %18, %17 : vector<1x128xf32>
    %c0_14 = arith.constant 0 : index
    %c0_15 = arith.constant 0 : index
    %20 = vector.load %arg6[%c0_14, %c0_15] : memref<2x128xf32, #tpu.memory_space<vmem>>, vector<1x128xf32>
    tpu.vector_store %arg6[%c0_14, %c0_15], %19 {strides = array<i32>} : memref<2x128xf32, #tpu.memory_space<vmem>>, vector<1x128xf32>,
    %cst_16 = arith.constant 1.000000e+00 : f32
    %21 = vector.broadcast %cst_16 : f32 to vector<1x128xf32>
    %22 = arith.subf %21, %19 : vector<1x128xf32>
    %c1 = arith.constant 1 : index
    %c0_17 = arith.constant 0 : index
    %23 = vector.load %arg6[%c1, %c0_17] : memref<2x128xf32, #tpu.memory_space<vmem>>, vector<1x128xf32>
    tpu.vector_store %arg6[%c1, %c0_17], %22 {strides = array<i32>} : memref<2x128xf32, #tpu.memory_space<vmem>>, vector<1x128xf32>,
    return
  }
  func.func @transform_0(%arg0: i32) -> (i32, i32) {
    %c0_i32 = arith.constant 0 : i32
    %c0_i32_0 = arith.constant 0 : i32
    return %arg0, %c0_i32 : i32, i32
  }
  func.func @transform_1(%arg0: i32) -> (i32, i32) {
    %c0_i32 = arith.constant 0 : i32
    %c0_i32_0 = arith.constant 0 : i32
    %c0_i32_1 = arith.constant 0 : i32
    return %c0_i32, %c0_i32_0 : i32, i32
  }
  func.func @transform_2(%arg0: i32) -> (i32, i32) {
    %c0_i32 = arith.constant 0 : i32
    %c0_i32_0 = arith.constant 0 : i32
    %c0_i32_1 = arith.constant 0 : i32
    return %c0_i32, %c0_i32_0 : i32, i32
  }
  func.func @transform_3(%arg0: i32) -> (i32, i32) {
    %c0_i32 = arith.constant 0 : i32
    %c0_i32_0 = arith.constant 0 : i32
    %c0_i32_1 = arith.constant 0 : i32
    return %c0_i32, %c0_i32_0 : i32, i32
  }
  func.func @transform_4(%arg0: i32) -> (i32, i32) {
    %c0_i32 = arith.constant 0 : i32
    %c0_i32_0 = arith.constant 0 : i32
    %c0_i32_1 = arith.constant 0 : i32
    return %c0_i32, %c0_i32_0 : i32, i32
  }
  func.func @transform_5(%arg0: i32) -> (i32, i32) {
    %c0_i32 = arith.constant 0 : i32
    %c0_i32_0 = arith.constant 0 : i32
    return %c0_i32, %arg0 : i32, i32
  }
}

</mosaic_0001>

<llo_original>
// kernel: tpu_custom_call.1
$region0: #{tpu_custom_call.1}
  #allocation0 [shape = 'u32[]', space=smem, size = 0x4, offset = 0x4, fixed_abs, tag = 'smem constant byte address 0x4 - core index']
  #allocation1 [shape = 'u32[144,128]{1,0:T(1,128)}', space=vmem, size = 0x12000, scoped, tag = 'internal scratch']
  #allocation2 [shape = 'f32[1,1]{1,0:T(1,128)S(1)}', space=vmem, size = 0x200, scoped, tag = 'scoped memory for tpu_custom_call.1']
  %s0 = inlined_call_operand.vmem [shape: f32[256,32], index: 0, kind: input, shape index: {}]
  %s1 = inlined_call_operand.vmem [shape: f32[32,32], index: 1, kind: input, shape index: {}]
  %s2 = inlined_call_operand.vmem [shape: f32[1,32], index: 2, kind: input, shape index: {}]
  %s3 = inlined_call_operand.vmem [shape: f32[1,32], index: 3, kind: input, shape index: {}]
  %s4 = inlined_call_operand.<no memory space> [shape: f32[1,1], index: 4, kind: input, shape index: {}]
  %s5 = inlined_call_operand.hbm [shape: f32[2,256], index: 5, kind: output, shape index: {}]
  %s6 = sld [smem:[#allocation0]]
  $region53: #{tpu_custom_call.1} parent=0
    _
  %s8 = ssub.s32 1, %s6
  %s9 = scalar_select 0, %s8, %s6
  %v10 = vstv %s4
  %11 = vst [vmem:[#allocation2] sm:$0x1] %v10
  $region1: #{tpu_custom_call.1} parent=0
    #allocation3 [shape = 'u8[2048]{0}', space=vmem, size = 0x800, scoped, tag = 'output window, operand 0']
    #allocation4 [shape = 's32[2]{0}', space=sflag, size = 0x8, scoped, tag = 'scoped memory for tpu_custom_call.1']
    %12 = vsyncpa [#allocation4], 0
    %s13 = scalar_lea.sflag [#allocation4], 1
    %14 = vsyncpa %s13, 0
    loop: start=0, step=1, limit=4
    $region2: #{tpu_custom_call.1} parent=1 // loop_pre_header
      _
    $region3: #{tpu_custom_call.1} parent=1 // loop_header
      %s16 = sphi 0, %s20
      %p17 = scmp.ge.s32.totalorder %s16, 4
      %s26 = sphi 0, %s28
      %s29 = sphi 0, %s26
      %s30 = sphi 0, %s29
      %s46 = sphi 0, %s30
      %s50 = sphi 0, %s50
      %s52 = sphi 0, %s50
      %s53 = sphi 0, %s52
      %s67 = sphi 0, %s53
      %s71 = sphi 0, %s71
      %s73 = sphi 0, %s71
      %s74 = sphi 0, %s73
      %s88 = sphi 0, %s74
      %s92 = sphi 0, %s92
      %s94 = sphi 0, %s92
      %s95 = sphi 0, %s94
      %s109 = sphi 0, %s95
      %s113 = sphi 0, %s113
      %s115 = sphi 0, %s113
      %s116 = sphi 0, %s115
      %s130 = sphi 0, %s116
      %s136 = sphi 0, %s138
      %s139 = sphi 0, %s136
      %s140 = sphi 0, %s139
      %s156 = sphi 0, %s140
    $region4: #{tpu_custom_call.1} parent=1 // loop_header_branch
      %19 = sbr.rel (%p17) target = $region8
    $region5: #{tpu_custom_call.1} parent=1 // loop_body
      %s21 = ssub.s32 %s16, 1
      %s22 = ssub.s32 %s16, 2
      %s23 = sadd.s32 %s16, 1
      %s24 = ssub.s32 %s16, %s23
      %p25 = scmp.eq.s32.totalorder %s24, 0
      %s27 = sadd.s32 %s26, 1
      %s28 = scalar_select %p25, %s26, %s27
      %p31 = pneg %p25
      %p32 = scmp.eq.s32.totalorder %s16, 1
      %p33 = por %p31, %p32
      %p34 = scmp.ne.s32.totalorder %s26, %s29
      %p35 = scmp.eq.s32.totalorder %s16, 0
      %p36 = por %p34, %p35
      %p37 = scmp.ne.s32.totalorder %s26, %s29
      %p38 = scmp.eq.s32.totalorder %s21, 1
      %p39 = por %p37, %p38
      %p40 = scmp.ne.s32.totalorder %s29, %s30
      %p41 = scmp.eq.s32.totalorder %s21, 0
      %p42 = por %p40, %p41
      %p43 = scmp.ne.s32.totalorder %s29, %s30
      %p44 = scmp.eq.s32.totalorder %s22, 1
      %p45 = por %p43, %p44
      %p47 = scmp.ne.s32.totalorder %s30, %s46
      %p48 = scmp.eq.s32.totalorder %s22, 0
      %p49 = por %p47, %p48
      %s51 = sadd.s32 %s50, 1
      %p54 = scmp.eq.s32.totalorder %s16, 1
      %p55 = scmp.ne.s32.totalorder %s50, %s52
      %p56 = scmp.eq.s32.totalorder %s16, 0
      %p57 = por %p55, %p56
      %p58 = scmp.ne.s32.totalorder %s50, %s52
      %p59 = scmp.eq.s32.totalorder %s21, 1
      %p60 = por %p58, %p59
      %p61 = scmp.ne.s32.totalorder %s52, %s53
      %p62 = scmp.eq.s32.totalorder %s21, 0
      %p63 = por %p61, %p62
      %p64 = scmp.ne.s32.totalorder %s52, %s53
      %p65 = scmp.eq.s32.totalorder %s22, 1
      %p66 = por %p64, %p65
      %p68 = scmp.ne.s32.totalorder %s53, %s67
      %p69 = scmp.eq.s32.totalorder %s22, 0
      %p70 = por %p68, %p69
      %s72 = sadd.s32 %s71, 1
      %p75 = scmp.eq.s32.totalorder %s16, 1
      %p76 = scmp.ne.s32.totalorder %s71, %s73
      %p77 = scmp.eq.s32.totalorder %s16, 0
      %p78 = por %p76, %p77
      %p79 = scmp.ne.s32.totalorder %s71, %s73
      %p80 = scmp.eq.s32.totalorder %s21, 1
      %p81 = por %p79, %p80
      %p82 = scmp.ne.s32.totalorder %s73, %s74
      %p83 = scmp.eq.s32.totalorder %s21, 0
      %p84 = por %p82, %p83
      %p85 = scmp.ne.s32.totalorder %s73, %s74
      %p86 = scmp.eq.s32.totalorder %s22, 1
      %p87 = por %p85, %p86
      %p89 = scmp.ne.s32.totalorder %s74, %s88
      %p90 = scmp.eq.s32.totalorder %s22, 0
      %p91 = por %p89, %p90
      %s93 = sadd.s32 %s92, 1
      %p96 = scmp.eq.s32.totalorder %s16, 1
      %p97 = scmp.ne.s32.totalorder %s92, %s94
      %p98 = scmp.eq.s32.totalorder %s16, 0
      %p99 = por %p97, %p98
      %p100 = scmp.ne.s32.totalorder %s92, %s94
      %p101 = scmp.eq.s32.totalorder %s21, 1
      %p102 = por %p100, %p101
      %p103 = scmp.ne.s32.totalorder %s94, %s95
      %p104 = scmp.eq.s32.totalorder %s21, 0
      %p105 = por %p103, %p104
      %p106 = scmp.ne.s32.totalorder %s94, %s95
      %p107 = scmp.eq.s32.totalorder %s22, 1
      %p108 = por %p106, %p107
      %p110 = scmp.ne.s32.totalorder %s95, %s109
      %p111 = scmp.eq.s32.totalorder %s22, 0
      %p112 = por %p110, %p111
      %s114 = sadd.s32 %s113, 1
      %p117 = scmp.eq.s32.totalorder %s16, 1
      %p118 = scmp.ne.s32.totalorder %s113, %s115
      %p119 = scmp.eq.s32.totalorder %s16, 0
      %p120 = por %p118, %p119
      %p121 = scmp.ne.s32.totalorder %s113, %s115
      %p122 = scmp.eq.s32.totalorder %s21, 1
      %p123 = por %p121, %p122
      %p124 = scmp.ne.s32.totalorder %s115, %s116
      %p125 = scmp.eq.s32.totalorder %s21, 0
      %p126 = por %p124, %p125
      %p127 = scmp.ne.s32.totalorder %s115, %s116
      %p128 = scmp.eq.s32.totalorder %s22, 1
      %p129 = por %p127, %p128
      %p131 = scmp.ne.s32.totalorder %s116, %s130
      %p132 = scmp.eq.s32.totalorder %s22, 0
      %p133 = por %p131, %p132
      %s134 = ssub.s32 %s16, %s23
      %p135 = scmp.eq.s32.totalorder %s134, 0
      %s137 = sadd.s32 %s136, 1
      %s138 = scalar_select %p135, %s136, %s137
      %p141 = pneg %p135
      %p142 = scmp.eq.s32.totalorder %s16, 1
      %p143 = por %p141, %p142
      %p144 = scmp.ne.s32.totalorder %s136, %s139
      %p145 = scmp.eq.s32.totalorder %s16, 0
      %p146 = por %p144, %p145
      %p147 = scmp.ne.s32.totalorder %s136, %s139
      %p148 = scmp.eq.s32.totalorder %s21, 1
      %p149 = por %p147, %p148
      %p150 = scmp.ne.s32.totalorder %s139, %s140
      %p151 = scmp.eq.s32.totalorder %s21, 0
      %p152 = por %p150, %p151
      %p153 = scmp.ne.s32.totalorder %s139, %s140
      %p154 = scmp.eq.s32.totalorder %s22, 1
      %p155 = por %p153, %p154
      %p157 = scmp.ne.s32.totalorder %s140, %s156
      %p158 = scmp.eq.s32.totalorder %s22, 0
      %p159 = por %p157, %p158
      %p160 = scmp.le.s32.totalorder 1, %s16
      %p161 = scmp.lt.s32.totalorder %s16, 3
      %p162 = pnand %p160, %p161
      %p163 = pneg %p162
      // Predicated region
      $region9: #{tpu_custom_call.1} parent=5 // pred_check
        _
      $region10: #{tpu_custom_call.1} parent=5 // pred_check_branch
        %165 = sbr.rel (%p162) target = $region12
      $region11: #{tpu_custom_call.1} parent=5 // pred_region
        %s166 = ssub.s32 %s16, 1
        // Predicated region
        $region13: #{tpu_custom_call.1} parent=11 // pred_check
          %p167 = pneg %p63
        $region14: #{tpu_custom_call.1} parent=11 // pred_check_branch
          %169 = sbr.rel (%p167) target = $region16
        $region15: #{tpu_custom_call.1} parent=11 // pred_region
          _
        $region16: #{tpu_custom_call.1} parent=11 // pred_fallthru
          _
        // Predicated region
        $region17: #{tpu_custom_call.1} parent=11 // pred_check
          %p170 = pneg %p84
        $region18: #{tpu_custom_call.1} parent=11 // pred_check_branch
          %172 = sbr.rel (%p170) target = $region20
        $region19: #{tpu_custom_call.1} parent=11 // pred_region
          _
        $region20: #{tpu_custom_call.1} parent=11 // pred_fallthru
          _
        // Predicated region
        $region21: #{tpu_custom_call.1} parent=11 // pred_check
          %p173 = pneg %p105
        $region22: #{tpu_custom_call.1} parent=11 // pred_check_branch
          %175 = sbr.rel (%p173) target = $region24
        $region23: #{tpu_custom_call.1} parent=11 // pred_region
          _
        $region24: #{tpu_custom_call.1} parent=11 // pred_fallthru
          _
        // Predicated region
        $region25: #{tpu_custom_call.1} parent=11 // pred_check
          %p176 = pneg %p126
        $region26: #{tpu_custom_call.1} parent=11 // pred_check_branch
          %178 = sbr.rel (%p176) target = $region28
        $region27: #{tpu_custom_call.1} parent=11 // pred_region
          _
        $region28: #{tpu_custom_call.1} parent=11 // pred_fallthru
          _
      $region12: #{tpu_custom_call.1} parent=5 // pred_fallthru
        _
      %p179 = scmp.lt.s32.totalorder %s16, 2
      // Predicated region
      $region29: #{tpu_custom_call.1} parent=5 // pred_check
        %p180 = pneg %p179
      $region30: #{tpu_custom_call.1} parent=5 // pred_check_branch
        %182 = sbr.rel (%p180) target = $region32
      $region31: #{tpu_custom_call.1} parent=5 // pred_region
        // Predicated region
        $region33: #{tpu_custom_call.1} parent=31 // pred_check
          %p183 = pneg %p36
        $region34: #{tpu_custom_call.1} parent=31 // pred_check_branch
          %185 = sbr.rel (%p183) target = $region36
        $region35: #{tpu_custom_call.1} parent=31 // pred_region
          %s186 = smul.u32 16, %s16
          %p187 = scmp.lt.s32.totalorder %s186, 31
          %s188 = scalar_select %p187, %s186, 31
          %s189 = smul.addr %s188, 8
          %s190 = scalar_lea.vmem %s0, %s189
          %s191 = smul.u32 16, %s16
        $region36: #{tpu_custom_call.1} parent=31 // pred_fallthru
          _
      $region32: #{tpu_custom_call.1} parent=5 // pred_fallthru
        _
      %p192 = scmp.le.s32.totalorder 1, %s16
      %p193 = scmp.lt.s32.totalorder %s16, 3
      %p194 = pnand %p192, %p193
      %p195 = pneg %p194
      // Predicated region
      $region37: #{tpu_custom_call.1} parent=5 // pred_check
        _
      $region38: #{tpu_custom_call.1} parent=5 // pred_check_branch
        %197 = sbr.rel (%p194) target = $region40
      $region39: #{tpu_custom_call.1} parent=5 // pred_region
        %s198 = ssub.s32 %s16, 1
        %s199 = smul.u32 16, %s21
        %p200 = scmp.lt.s32.totalorder %s199, 31
        %s201 = scalar_select %p200, %s199, 31
        %s202 = smul.addr %s201, 8
        %s203 = scalar_lea.vmem %s0, %s202
        %p204 = pneg %p42
        %p205 = pneg %p39
        %p206 = pneg %p63
        %p207 = pneg %p60
        %p208 = pneg %p84
        %p209 = pneg %p81
        %p210 = pneg %p105
        %p211 = pneg %p102
        %p212 = pneg %p126
        %p213 = pneg %p123
        %p214 = pneg %p152
        %p215 = pneg %p149
        %s216 = sand.u32 %s139, 1
        %s217 = scalar_lea.sflag [#allocation4], %s216
        %s218 = sand.u32 %s139, 1
        %s219 = smul.addr %s218, 2
        %s220 = scalar_lea.vmem [#allocation3], %s219
        %s221 = smul.u32 16, %s21
        %p222 = scmp.lt.s32.totalorder %s221, 31
        %s223 = scalar_select %p222, %s221, 31
        %s224 = smul.addr %s223, 8
        %s225 = scalar_lea.vmem %s0, %s224
        %s226 = smul.u32 16, %s21
        %v227 = vld [vmem:[%s225] sm:$0xff]
        %v228 = vld [vmem:[%s225 + $0x8] sm:$0xff]
        %v229 = vld [vmem:[%s225 + $0x10] sm:$0xff]
        %v230 = vld [vmem:[%s225 + $0x18] sm:$0xff]
        %v231 = vld [vmem:[%s225 + $0x20] sm:$0xff]
        %v232 = vld [vmem:[%s225 + $0x28] sm:$0xff]
        %v233 = vld [vmem:[%s225 + $0x30] sm:$0xff]
        %v234 = vld [vmem:[%s225 + $0x38] sm:$0xff]
        %v235 = vld [vmem:[%s225 + $0x40] sm:$0xff]
        %v236 = vld [vmem:[%s225 + $0x48] sm:$0xff]
        %v237 = vld [vmem:[%s225 + $0x50] sm:$0xff]
        %v238 = vld [vmem:[%s225 + $0x58] sm:$0xff]
        %v239 = vld [vmem:[%s225 + $0x60] sm:$0xff]
        %v240 = vld [vmem:[%s225 + $0x68] sm:$0xff]
        %v241 = vld [vmem:[%s225 + $0x70] sm:$0xff]
        %v242 = vld [vmem:[%s225 + $0x78] sm:$0xff]
        %v243 = vld [vmem:[%s1] sm:$0xff]
        %v244 = vld [vmem:[%s1 + $0x8] sm:$0xff]
        %v245 = vld [vmem:[%s1 + $0x10] sm:$0xff]
        %v246 = vld [vmem:[%s1 + $0x18] sm:$0xff]
        %v247 = vld [vmem:[%s2] sm:$0x1]
        %v249 = vlaneseq
        %v250 = vshrl.u32 %v249, 7
        %v251 = vsub.s32 0, %v250
        %v252 = vrot.slane %v247, %v251
        %vm254 = vcmask 261120
        %v256 = vsel %vm254, %v227, 0
        %v259 = vsel %vm254, %v228, 0
        %v262 = vsel %vm254, %v229, 0
        %v265 = vsel %vm254, %v230, 0
        %v268 = vsel %vm254, %v231, 0
        %v271 = vsel %vm254, %v232, 0
        %v274 = vsel %vm254, %v233, 0
        %v277 = vsel %vm254, %v234, 0
        %v280 = vsel %vm254, %v235, 0
        %v283 = vsel %vm254, %v236, 0
        %v286 = vsel %vm254, %v237, 0
        %v289 = vsel %vm254, %v238, 0
        %v292 = vsel %vm254, %v239, 0
        %v295 = vsel %vm254, %v240, 0
        %v298 = vsel %vm254, %v241, 0
        %v301 = vsel %vm254, %v242, 0
        %303 = vmatprep.subr.mxu0 0.0
        %304 = vmatpush1.msra.mxu0 %v243
        %305 = vmatprep.subr.mxu0 0.0
        %306 = vmatpush1.msra.mxu0 %v244
        %307 = vmatprep.subr.mxu0 0.0
        %308 = vmatpush1.msra.mxu0 %v245
        %309 = vmatprep.subr.mxu0 0.0
        %310 = vmatpush1.msra.mxu0 %v246
        %311 = vmatprep.subr.mxu0 0.0
        %312 = vmatpush1.msra.mxu0 0.0
        %313 = vmatprep.subr.mxu0 0.0
        %314 = vmatpush1.msra.mxu0 0.0
        %315 = vmatprep.subr.mxu0 0.0
        %316 = vmatpush1.msra.mxu0 0.0
        %317 = vmatprep.subr.mxu0 0.0
        %318 = vmatpush1.msra.mxu0 0.0
        %319 = vmatprep.subr.mxu0 0.0
        %320 = vmatpush1.msra.mxu0 0.0
        %321 = vmatprep.subr.mxu0 0.0
        %322 = vmatpush1.msra.mxu0 0.0
        %323 = vmatprep.subr.mxu0 0.0
        %324 = vmatpush1.msra.mxu0 0.0
        %325 = vmatprep.subr.mxu0 0.0
        %326 = vmatpush1.msra.mxu0 0.0
        %327 = vmatprep.subr.mxu0 0.0
        %328 = vmatpush1.msra.mxu0 0.0
        %329 = vmatprep.subr.mxu0 0.0
        %330 = vmatpush1.msra.mxu0 0.0
        %331 = vmatprep.subr.mxu0 0.0
        %332 = vmatpush1.msra.mxu0 0.0
        %333 = vmatprep.subr.mxu0 0.0
        %334 = vmatpush1.msra.mxu0 0.0
        %335 = vmatprep.subr.mxu0 0.0
        %336 = vmatpush1.msra.mxu0 0.0
        %337 = vmatprep.subr.mxu0 0.0
        %338 = vmatpush1.msra.mxu0 0.0
        %339 = vmatprep.subr.mxu0 0.0
        %340 = vmatpush1.msra.mxu0 0.0
        %341 = vmatprep.subr.mxu0 0.0
        %342 = vmatpush1.msra.mxu0 0.0
        %343 = vmatprep.subr.mxu0 0.0
        %344 = vmatpush1.msra.mxu0 0.0
        %345 = vmatprep.subr.mxu0 0.0
        %346 = vmatpush1.msra.mxu0 0.0
        %347 = vmatprep.subr.mxu0 0.0
        %348 = vmatpush1.msra.mxu0 0.0
        %349 = vmatprep.subr.mxu0 0.0
        %350 = vmatpush1.msra.mxu0 0.0
        %351 = vmatprep.subr.mxu0 0.0
        %352 = vmatpush1.msra.mxu0 0.0
        %353 = vmatprep.subr.mxu0 0.0
        %354 = vmatpush1.msra.mxu0 0.0
        %355 = vmatprep.subr.mxu0 0.0
        %356 = vmatpush1.msra.mxu0 0.0
        %357 = vmatprep.subr.mxu0 0.0
        %358 = vmatpush1.msra.mxu0 0.0
        %359 = vmatprep.subr.mxu0 0.0
        %360 = vmatpush1.msra.mxu0 0.0
        %361 = vmatprep.subr.mxu0 0.0
        %362 = vmatpush1.msra.mxu0 0.0
        %363 = vmatprep.subr.mxu0 0.0
        %364 = vmatpush1.msra.mxu0 0.0
        %365 = vmatprep.subr.mxu0 0.0
        %366 = vmatpush1.msra.mxu0 0.0
        %367 = vmatprep.mubr.f32.mxu0 0.0
        %368 = vmatmul.mubr.f32.gmra.mrb[0].mxu0 %v256
        %v369 = vpop.f32.mrb[0].mxu0
        %v370 = vadd.f32 %v252, %v369
        %v371 = vpop.f32.mrb[0].mxu0
        %372 = vmatprep.mubr.f32.mxu0 0.0
        %373 = vmatmul.mubr.f32.gmra.mrb[0].mxu0 %v259
        %v374 = vpop.f32.mrb[0].mxu0
        %v375 = vadd.f32 %v252, %v374
        %v376 = vpop.f32.mrb[0].mxu0
        %377 = vmatprep.mubr.f32.mxu0 0.0
        %378 = vmatmul.mubr.f32.gmra.mrb[0].mxu0 %v262
        %v379 = vpop.f32.mrb[0].mxu0
        %v380 = vadd.f32 %v252, %v379
        %v381 = vpop.f32.mrb[0].mxu0
        %382 = vmatprep.mubr.f32.mxu0 0.0
        %383 = vmatmul.mubr.f32.gmra.mrb[0].mxu0 %v265
        %v384 = vpop.f32.mrb[0].mxu0
        %v385 = vadd.f32 %v252, %v384
        %v386 = vpop.f32.mrb[0].mxu0
        %387 = vmatprep.mubr.f32.mxu0 0.0
        %388 = vmatmul.mubr.f32.gmra.mrb[0].mxu0 %v268
        %v389 = vpop.f32.mrb[0].mxu0
        %v390 = vadd.f32 %v252, %v389
        %v391 = vpop.f32.mrb[0].mxu0
        %392 = vmatprep.mubr.f32.mxu0 0.0
        %393 = vmatmul.mubr.f32.gmra.mrb[0].mxu0 %v271
        %v394 = vpop.f32.mrb[0].mxu0
        %v395 = vadd.f32 %v252, %v394
        %v396 = vpop.f32.mrb[0].mxu0
        %397 = vmatprep.mubr.f32.mxu0 0.0
        %398 = vmatmul.mubr.f32.gmra.mrb[0].mxu0 %v274
        %v399 = vpop.f32.mrb[0].mxu0
        %v400 = vadd.f32 %v252, %v399
        %v401 = vpop.f32.mrb[0].mxu0
        %402 = vmatprep.mubr.f32.mxu0 0.0
        %403 = vmatmul.mubr.f32.gmra.mrb[0].mxu0 %v277
        %v404 = vpop.f32.mrb[0].mxu0
        %v405 = vadd.f32 %v252, %v404
        %v406 = vpop.f32.mrb[0].mxu0
        %407 = vmatprep.mubr.f32.mxu0 0.0
        %408 = vmatmul.mubr.f32.gmra.mrb[0].mxu0 %v280
        %v409 = vpop.f32.mrb[0].mxu0
        %v410 = vadd.f32 %v252, %v409
        %v411 = vpop.f32.mrb[0].mxu0
        %412 = vmatprep.mubr.f32.mxu0 0.0
        %413 = vmatmul.mubr.f32.gmra.mrb[0].mxu0 %v283
        %v414 = vpop.f32.mrb[0].mxu0
        %v415 = vadd.f32 %v252, %v414
        %v416 = vpop.f32.mrb[0].mxu0
        %417 = vmatprep.mubr.f32.mxu0 0.0
        %418 = vmatmul.mubr.f32.gmra.mrb[0].mxu0 %v286
        %v419 = vpop.f32.mrb[0].mxu0
        %v420 = vadd.f32 %v252, %v419
        %v421 = vpop.f32.mrb[0].mxu0
        %422 = vmatprep.mubr.f32.mxu0 0.0
        %423 = vmatmul.mubr.f32.gmra.mrb[0].mxu0 %v289
        %v424 = vpop.f32.mrb[0].mxu0
        %v425 = vadd.f32 %v252, %v424
        %v426 = vpop.f32.mrb[0].mxu0
        %427 = vmatprep.mubr.f32.mxu0 0.0
        %428 = vmatmul.mubr.f32.gmra.mrb[0].mxu0 %v292
        %v429 = vpop.f32.mrb[0].mxu0
        %v430 = vadd.f32 %v252, %v429
        %v431 = vpop.f32.mrb[0].mxu0
        %432 = vmatprep.mubr.f32.mxu0 0.0
        %433 = vmatmul.mubr.f32.gmra.mrb[0].mxu0 %v295
        %v434 = vpop.f32.mrb[0].mxu0
        %v435 = vadd.f32 %v252, %v434
        %v436 = vpop.f32.mrb[0].mxu0
        %437 = vmatprep.mubr.f32.mxu0 0.0
        %438 = vmatmul.mubr.f32.gmra.mrb[0].mxu0 %v298
        %v439 = vpop.f32.mrb[0].mxu0
        %v440 = vadd.f32 %v252, %v439
        %v441 = vpop.f32.mrb[0].mxu0
        %442 = vmatprep.mubr.f32.mxu0 0.0
        %443 = vmatmul.mubr.f32.gmra.mrb[0].mxu0 %v301
        %v444 = vpop.f32.mrb[0].mxu0
        %v445 = vadd.f32 %v252, %v444
        %v446 = vpop.f32.mrb[0].mxu0
        %447 = vdwg.mxu0
        %v448 = vmax.f32 %v370, 0.0
        %v449 = vmax.f32 %v375, 0.0
        %v450 = vmax.f32 %v380, 0.0
        %v451 = vmax.f32 %v385, 0.0
        %v452 = vmax.f32 %v390, 0.0
        %v453 = vmax.f32 %v395, 0.0
        %v454 = vmax.f32 %v400, 0.0
        %v455 = vmax.f32 %v405, 0.0
        %v456 = vmax.f32 %v410, 0.0
        %v457 = vmax.f32 %v415, 0.0
        %v458 = vmax.f32 %v420, 0.0
        %v459 = vmax.f32 %v425, 0.0
        %v460 = vmax.f32 %v430, 0.0
        %v461 = vmax.f32 %v435, 0.0
        %v462 = vmax.f32 %v440, 0.0
        %v463 = vmax.f32 %v445, 0.0
        %v464 = vld [vmem:[%s3] sm:$0x1]
        %v465 = vld [vmem:[#allocation2] sm:$0x1]
        %467 = vset.pattern.permute.xlu0 0
        %468 = vperm.xlu0 %467, %v465
        %v469 = vpop.permute.xlu0 %468
        %v471 = vlaneseq
        %v472 = vshrl.u32 %v471, 7
        %v473 = vsub.s32 0, %v472
        %v474 = vrot.slane %v469, %v473
        %v476 = vsel %vm254, %v464, 0
        %v479 = vsel %vm254, %v448, 0
        %v482 = vsel %vm254, %v449, 0
        %v485 = vsel %vm254, %v450, 0
        %v488 = vsel %vm254, %v451, 0
        %v491 = vsel %vm254, %v452, 0
        %v494 = vsel %vm254, %v453, 0
        %v497 = vsel %vm254, %v454, 0
        %v500 = vsel %vm254, %v455, 0
        %v503 = vsel %vm254, %v456, 0
        %v506 = vsel %vm254, %v457, 0
        %v509 = vsel %vm254, %v458, 0
        %v512 = vsel %vm254, %v459, 0
        %v515 = vsel %vm254, %v460, 0
        %v518 = vsel %vm254, %v461, 0
        %v521 = vsel %vm254, %v462, 0
        %v524 = vsel %vm254, %v463, 0
        %526 = vmatprep.subr.mxu0 0.0
        %527 = vmatpush1.xpose.msra.mxu0 %v479
        %528 = vmatprep.subr.mxu0 0.0
        %529 = vmatpush1.xpose.msra.mxu0 %v482
        %530 = vmatprep.subr.mxu0 0.0
        %531 = vmatpush1.xpose.msra.mxu0 %v485
        %532 = vmatprep.subr.mxu0 0.0
        %533 = vmatpush1.xpose.msra.mxu0 %v488
        %534 = vmatprep.subr.mxu0 0.0
        %535 = vmatpush1.xpose.msra.mxu0 %v491
        %536 = vmatprep.subr.mxu0 0.0
        %537 = vmatpush1.xpose.msra.mxu0 %v494
        %538 = vmatprep.subr.mxu0 0.0
        %539 = vmatpush1.xpose.msra.mxu0 %v497
        %540 = vmatprep.subr.mxu0 0.0
        %541 = vmatpush1.xpose.msra.mxu0 %v500
        %542 = vmatprep.subr.mxu0 0.0
        %543 = vmatpush1.xpose.msra.mxu0 %v503
        %544 = vmatprep.subr.mxu0 0.0
        %545 = vmatpush1.xpose.msra.mxu0 %v506
        %546 = vmatprep.subr.mxu0 0.0
        %547 = vmatpush1.xpose.msra.mxu0 %v509
        %548 = vmatprep.subr.mxu0 0.0
        %549 = vmatpush1.xpose.msra.mxu0 %v512
        %550 = vmatprep.subr.mxu0 0.0
        %551 = vmatpush1.xpose.msra.mxu0 %v515
        %552 = vmatprep.subr.mxu0 0.0
        %553 = vmatpush1.xpose.msra.mxu0 %v518
        %554 = vmatprep.subr.mxu0 0.0
        %555 = vmatpush1.xpose.msra.mxu0 %v521
        %556 = vmatprep.subr.mxu0 0.0
        %557 = vmatpush1.xpose.msra.mxu0 %v524
        %558 = vmatprep.subr.mxu0 0.0
        %559 = vmatpush1.xpose.msra.mxu0 0.0
        %560 = vmatprep.subr.mxu0 0.0
        %561 = vmatpush1.xpose.msra.mxu0 0.0
        %562 = vmatprep.subr.mxu0 0.0
        %563 = vmatpush1.xpose.msra.mxu0 0.0
        %564 = vmatprep.subr.mxu0 0.0
        %565 = vmatpush1.xpose.msra.mxu0 0.0
        %566 = vmatprep.subr.mxu0 0.0
        %567 = vmatpush1.xpose.msra.mxu0 0.0
        %568 = vmatprep.subr.mxu0 0.0
        %569 = vmatpush1.xpose.msra.mxu0 0.0
        %570 = vmatprep.subr.mxu0 0.0
        %571 = vmatpush1.xpose.msra.mxu0 0.0
        %572 = vmatprep.subr.mxu0 0.0
        %573 = vmatpush1.xpose.msra.mxu0 0.0
        %574 = vmatprep.subr.mxu0 0.0
        %575 = vmatpush1.xpose.msra.mxu0 0.0
        %576 = vmatprep.subr.mxu0 0.0
        %577 = vmatpush1.xpose.msra.mxu0 0.0
        %578 = vmatprep.subr.mxu0 0.0
        %579 = vmatpush1.xpose.msra.mxu0 0.0
        %580 = vmatprep.subr.mxu0 0.0
        %581 = vmatpush1.xpose.msra.mxu0 0.0
        %582 = vmatprep.subr.mxu0 0.0
        %583 = vmatpush1.xpose.msra.mxu0 0.0
        %584 = vmatprep.subr.mxu0 0.0
        %585 = vmatpush1.xpose.msra.mxu0 0.0
        %586 = vmatprep.subr.mxu0 0.0
        %587 = vmatpush1.xpose.msra.mxu0 0.0
        %588 = vmatprep.subr.mxu0 0.0
        %589 = vmatpush1.xpose.msra.mxu0 0.0
        %590 = vmatprep.mubr.f32.mxu0 0.0
        %591 = vmatmul.mubr.f32.gmra.mrb[0].mxu0 %v476
        %v592 = vpop.f32.mrb[0].mxu0
        %v593 = vadd.f32 %v474, %v592
        %v594 = vpop.f32.mrb[0].mxu0
        %595 = vdwg.mxu0
        %v596 = vsub.f32 0.0, %v593
        %v597 = vmul.f32 %v596, 1.442695
        %v598 = vpow.pop %v597
        %v599 = vadd.f32 %v598, 1.0
        %v600 = vrcp.pop %v599
        %v601 = vmul.f32 1.0, %v600
        %602 = vst [vmem:[%s220] sm:$0x1] %v601
        %v603 = vsub.f32 1.0, %v601
        %604 = vst [vmem:[%s220 + $0x1] sm:$0x1] %v603
        %s605 = sand.u32 %s139, 1
        %s606 = scalar_lea.sflag [#allocation4], %s605
        %s607 = sand.u32 %s139, 1
        %s608 = smul.addr %s607, 2
        %s609 = scalar_lea.vmem [#allocation3], %s608
        // Predicated region
        $region41: #{tpu_custom_call.1} parent=39 // pred_check
          %p610 = pneg %p149
        $region42: #{tpu_custom_call.1} parent=39 // pred_check_branch
          %612 = sbr.rel (%p610) target = $region44
        $region43: #{tpu_custom_call.1} parent=39 // pred_region
          %s614 = ssub.s32 32, 32
          %615 = vsyncadd %s606, %s614
          %s616 = smul.addr %s21, 32
          %s617 = scalar_lea.hbm %s5, %s616
          %s619 = sshll.u32 %s609, 4
          %s620 = int_to_ptr.vmem [resolvable:$true] %s619
          %622 = dma.vmem_to_hbm [thread:$0]  %s620, 32, %s617, %s606
        $region44: #{tpu_custom_call.1} parent=39 // pred_fallthru
          _
      $region40: #{tpu_custom_call.1} parent=5 // pred_fallthru
        _
      %p623 = scmp.le.s32.totalorder 2, %s16
      // Predicated region
      $region45: #{tpu_custom_call.1} parent=5 // pred_check
        %p624 = pneg %p623
      $region46: #{tpu_custom_call.1} parent=5 // pred_check_branch
        %626 = sbr.rel (%p624) target = $region48
      $region47: #{tpu_custom_call.1} parent=5 // pred_region
        %s627 = ssub.s32 %s16, 2
        // Predicated region
        $region49: #{tpu_custom_call.1} parent=47 // pred_check
          %p628 = pneg %p155
        $region50: #{tpu_custom_call.1} parent=47 // pred_check_branch
          %630 = sbr.rel (%p628) target = $region52
        $region51: #{tpu_custom_call.1} parent=47 // pred_region
          %s631 = sand.u32 %s140, 1
          %s632 = scalar_lea.sflag [#allocation4], %s631
          %s633 = sand.u32 %s140, 1
          %s634 = smul.addr %s633, 2
          %s635 = scalar_lea.vmem [#allocation3], %s634
          %636 = dma.done %s632, 32
        $region52: #{tpu_custom_call.1} parent=47 // pred_fallthru
          _
      $region48: #{tpu_custom_call.1} parent=5 // pred_fallthru
        _
    $region6: #{tpu_custom_call.1} parent=1 // loop_footer
      %s20 = sadd.s32 1, %s16
    $region7: #{tpu_custom_call.1} parent=1 // loop_footer_branch
      %15 = sbr.rel target = $region3
    $region8: #{tpu_custom_call.1} parent=1 // loop_exit
      _
    %637 = vsyncpa [#allocation4], 1
    %s638 = scalar_lea.sflag [#allocation4], 1
    %639 = vsyncpa %s638, 1

</llo_original>
